<compile_context>
chip_gen: v5e
topology: v5e:2x2
jax: 0.10.0
libtpu: 0.0.40
codegen_flags: <defaults>
</compile_context>

<pallas_src>
import functools

import jax
import jax.numpy as jnp
from jax import lax
from jax.experimental import pallas as pl
from jax.experimental.pallas import tpu as pltpu

_LANES = 128
_SUBLANES = 8


def _mse_partial_kernel(x1_ref, x2_ref, out_ref, *, rows_total, block_rows):
    """One grid step: (8, 128) partial sums of (x1 - x2)^2 over this block.

    x1_ref, x2_ref: (block_rows, 128) VMEM input blocks
    out_ref:        (8, 128)          VMEM per-block partial-sum output
    """
    d = x1_ref[...].astype(jnp.float32) - x2_ref[...].astype(jnp.float32)
    sq = d * d

    if rows_total % block_rows != 0:
        # Last block extends past the end of the (rows_total, 128) array; the
        # OOB rows contain unspecified data, so zero them (row-only mask: the
        # ragged tail is always a whole number of rows).
        i = pl.program_id(0)
        row_ids = lax.broadcasted_iota(jnp.int32, sq.shape, 0) + i * block_rows
        sq = jnp.where(row_ids < rows_total, sq, 0.0)

    # Fold (block_rows, 128) -> (block_rows//8, 8, 128) and reduce the leading
    # axis: pure VPU vreg adds, no cross-lane/sublane (XLU) work and no scalar
    # round trip in the steady-state loop.
    out_ref[...] = jnp.sum(sq.reshape(-1, _SUBLANES, _LANES), axis=0)


def mse_flattened_loss(x1, x2, *, block_rows=8192):
    """Pallas equivalent of MSEFlattenedLoss.forward(x1, x2) -> scalar float32."""
    assert x1.shape == x2.shape, "MSELoss requires matching shapes"
    n = x1.size
    x1f = jnp.ravel(x1)
    x2f = jnp.ravel(x2)

    # Zero-pad to a multiple of one full (8, 128) vreg tile. Both inputs get the
    # same zero padding, so padded elements contribute exactly 0 to the sum.
    # (For typical NN shapes n is already a multiple of 1024 and this is a no-op.)
    pad = (-n) % (_SUBLANES * _LANES)
    if pad:
        x1f = jnp.pad(x1f, (0, pad))
        x2f = jnp.pad(x2f, (0, pad))
    rows = (n + pad) // _LANES  # multiple of 8

    # Block rows: multiple of 8, never larger than the row count (small inputs
    # get a single exact block). 8192 rows * 128 lanes * 4 B = 4 MiB per input.
    block_rows = min(block_rows, rows)
    block_rows = max(_SUBLANES, (block_rows // _SUBLANES) * _SUBLANES)
    grid = pl.cdiv(rows, block_rows)

    x1_2d = x1f.reshape(rows, _LANES)
    x2_2d = x2f.reshape(rows, _LANES)

    kernel = functools.partial(
        _mse_partial_kernel, rows_total=rows, block_rows=block_rows)

    partials = pl.pallas_call(
        kernel,
        out_shape=jax.ShapeDtypeStruct((grid * _SUBLANES, _LANES), jnp.float32),
        grid=(grid,),
        in_specs=[
            pl.BlockSpec((block_rows, _LANES), lambda i: (i, 0)),
            pl.BlockSpec((block_rows, _LANES), lambda i: (i, 0)),
        ],
        out_specs=pl.BlockSpec((_SUBLANES, _LANES), lambda i: (i, 0)),
        compiler_params=pltpu.CompilerParams(
            dimension_semantics=("parallel",),  # independent partial sums
            vmem_limit_bytes=32 << 20,
        ),
    )(x1_2d, x2_2d)

    # Tiny final reduction (grid*8 x 128 f32) + mean normalization in XLA.
    return jnp.sum(partials) / jnp.float32(n)


def _reference(x1, x2):
    diff = x1.astype(jnp.float32) - x2.astype(jnp.float32)
    return jnp.mean(diff * diff)


if __name__ == "__main__":
    key = jax.random.PRNGKey(0)
    k1, k2 = jax.random.split(key)
    # NCHW inputs, consistent with the PyTorch module's view(B, -1) usage.
    x1 = jax.random.normal(k1, (2, 4, 16, 16), dtype=jnp.float32)
    x2 = jax.random.normal(k2, (2, 4, 16, 16), dtype=jnp.float32)

    loss = jax.jit(mse_flattened_loss)(x1, x2)
    loss = jax.block_until_ready(loss)

    ref = _reference(x1, x2)
    assert jnp.allclose(loss, ref, rtol=1e-5, atol=1e-6), (loss, ref)
    print("KERNEL_OK")
</pallas_src>

<mosaic_0001>
module attributes {stable_mosaic.version = 11 : i64} {
  func.func @_mse_partial_kernel(%arg0: i32, %arg1: memref<16x128xf32, #tpu.memory_space<vmem>>, %arg2: memref<16x128xf32, #tpu.memory_space<vmem>>, %arg3: memref<8x128xf32, #tpu.memory_space<vmem>>) attributes {dimension_semantics = [#tpu.dimension_semantics<parallel>], iteration_bounds = array<i64: 1>, scalar_prefetch = 0 : i64, scratch_operands = 0 : i64, tpu.core_type = #tpu.core_type<tc>, window_params = [{transform_indices = @transform_0, window_bounds = array<i64: 16, 128>}, {transform_indices = @transform_1, window_bounds = array<i64: 16, 128>}, {transform_indices = @transform_2, window_bounds = array<i64: 8, 128>}]} {
    %c0 = arith.constant 0 : index
    %c0_0 = arith.constant 0 : index
    %0 = vector.load %arg1[%c0, %c0_0] : memref<16x128xf32, #tpu.memory_space<vmem>>, vector<16x128xf32>
    %c0_1 = arith.constant 0 : index
    %c0_2 = arith.constant 0 : index
    %1 = vector.load %arg2[%c0_1, %c0_2] : memref<16x128xf32, #tpu.memory_space<vmem>>, vector<16x128xf32>
    %2 = arith.subf %0, %1 : vector<16x128xf32>
    %3 = arith.mulf %2, %2 : vector<16x128xf32>
    %4 = vector.shape_cast %3 : vector<16x128xf32> to vector<2x8x128xf32>
    %cst = arith.constant dense<0.000000e+00> : vector<8x128xf32>
    %5 = vector.multi_reduction <add>, %4, %cst [0] : vector<2x8x128xf32> to vector<8x128xf32>
    %c0_3 = arith.constant 0 : index
    %c0_4 = arith.constant 0 : index
    %6 = vector.load %arg3[%c0_3, %c0_4] : memref<8x128xf32, #tpu.memory_space<vmem>>, vector<8x128xf32>
    tpu.vector_store %arg3[%c0_3, %c0_4], %5 {strides = array<i32>} : memref<8x128xf32, #tpu.memory_space<vmem>>, vector<8x128xf32>,
    return
  }
  func.func @transform_0(%arg0: i32) -> (i32, i32) {
    %c0_i32 = arith.constant 0 : i32
    %c0_i32_0 = arith.constant 0 : i32
    return %arg0, %c0_i32 : i32, i32
  }
  func.func @transform_1(%arg0: i32) -> (i32, i32) {
    %c0_i32 = arith.constant 0 : i32
    %c0_i32_0 = arith.constant 0 : i32
    return %arg0, %c0_i32 : i32, i32
  }
  func.func @transform_2(%arg0: i32) -> (i32, i32) {
    %c0_i32 = arith.constant 0 : i32
    %c0_i32_0 = arith.constant 0 : i32
    return %arg0, %c0_i32 : i32, i32
  }
}

</mosaic_0001>

<llo_original>
// kernel: mse_flattened_loss.1
$region0: #{mse_flattened_loss.1}
  #allocation0 [shape = 'u32[]', space=smem, size = 0x4, offset = 0x4, fixed_abs, tag = 'smem constant byte address 0x4 - core index']
  #allocation1 [shape = 'u32[72,128]{1,0:T(1,128)}', space=vmem, size = 0x9000, scoped, tag = 'internal scratch']
  %s0 = inlined_call_operand.vmem [shape: f32[16,128], index: 0, kind: input, shape index: {}]
  %s1 = inlined_call_operand.vmem [shape: f32[16,128], index: 1, kind: input, shape index: {}]
  %s2 = inlined_call_operand.vmem [shape: f32[8,128], index: 2, kind: output, shape index: {}]
  %s3 = sld [smem:[#allocation0]]
  $region18: #{mse_flattened_loss.1} parent=0
    _
  %s5 = ssub.s32 1, %s3
  %s6 = scalar_select 0, %s5, %s3
  // Predicated region
  $region2: #{mse_flattened_loss.1} parent=0 // pred_check
    _
  $region3: #{mse_flattened_loss.1} parent=0 // pred_check_branch
    %8 = sbr.rel (0) target = $region5
  $region4: #{mse_flattened_loss.1} parent=0 // pred_region
    _
  $region5: #{mse_flattened_loss.1} parent=0 // pred_fallthru
    _
  // Predicated region
  $region6: #{mse_flattened_loss.1} parent=0 // pred_check
    _
  $region7: #{mse_flattened_loss.1} parent=0 // pred_check_branch
    %10 = sbr.rel (0) target = $region9
  $region8: #{mse_flattened_loss.1} parent=0 // pred_region
    _
  $region9: #{mse_flattened_loss.1} parent=0 // pred_fallthru
    _
  %v11 = vld [vmem:[%s0] sm:$0xff]
  %v12 = vld [vmem:[%s0 + $0x8] sm:$0xff]
  %v13 = vld [vmem:[%s1] sm:$0xff]
  %v14 = vld [vmem:[%s1 + $0x8] sm:$0xff]
  %v15 = vsub.f32 %v11, %v13
  %v16 = vsub.f32 %v12, %v14
  %v17 = vmul.f32 %v15, %v15
  %v18 = vmul.f32 %v16, %v16
  %v19 = vadd.f32 %v17, %v18
  %20 = vst [vmem:[%s2] sm:$0xff] %v19
  // Predicated region
  $region10: #{mse_flattened_loss.1} parent=0 // pred_check
    _
  $region11: #{mse_flattened_loss.1} parent=0 // pred_check_branch
    %22 = sbr.rel (0) target = $region13
  $region12: #{mse_flattened_loss.1} parent=0 // pred_region
    _
  $region13: #{mse_flattened_loss.1} parent=0 // pred_fallthru
    _
  // Predicated region
  $region14: #{mse_flattened_loss.1} parent=0 // pred_check
    _
  $region15: #{mse_flattened_loss.1} parent=0 // pred_check_branch
    %24 = sbr.rel (0) target = $region17
  $region16: #{mse_flattened_loss.1} parent=0 // pred_region
    _
  $region17: #{mse_flattened_loss.1} parent=0 // pred_fallthru
    _

</llo_original>
